<compile_context>
chip_gen: v7x
topology: tpu7x:2x2x1
jax: 0.10.0
libtpu: 0.0.40
codegen_flags: <defaults>
</compile_context>

<pallas_src>
import functools

import jax
import jax.numpy as jnp
from jax.experimental import pallas as pl
from jax.experimental.pallas import tpu as pltpu


# ----------------------------------------------------------------------------
# Interpolation-matrix construction (plain-JAX glue / "parameter" setup).
# Matches PyTorch bilinear upsample/downsample with align_corners=False:
#   src = clip((dst + 0.5) * (in/out) - 0.5, 0, in-1); lo = floor(src); hi = min(lo+1, in-1)
# ----------------------------------------------------------------------------
def _interp_matrix(out_size: int, in_size: int) -> jnp.ndarray:
    scale = in_size / out_size
    dst = jnp.arange(out_size, dtype=jnp.float32)
    src = (dst + 0.5) * scale - 0.5
    src = jnp.clip(src, 0.0, float(in_size - 1))
    lo = jnp.floor(src).astype(jnp.int32)
    hi = jnp.minimum(lo + 1, in_size - 1)
    frac = src - lo.astype(jnp.float32)
    oh_lo = jax.nn.one_hot(lo, in_size, dtype=jnp.float32)
    oh_hi = jax.nn.one_hot(hi, in_size, dtype=jnp.float32)
    return oh_lo * (1.0 - frac)[:, None] + oh_hi * frac[:, None]   # (out, in)


# ----------------------------------------------------------------------------
# VMEM sizing helpers (static, trace-time)
# ----------------------------------------------------------------------------
def _pad_tile(r: int, c: int) -> int:
    # elements after (8, 128) sublane/lane padding — rough but good enough for sizing
    return (-(-r // 8) * 8) * (-(-c // 128) * 128)


def _per_channel_vmem_bytes(h_in, w_in, h_out, w_out, itemsize) -> int:
    dma = 2 * (_pad_tile(h_in, w_in) + _pad_tile(h_out, w_out)) * itemsize     # double-buffered IO
    compute = (_pad_tile(h_in, w_in) + _pad_tile(h_in, w_out)
               + _pad_tile(h_out, w_out)) * 2                                   # bf16 slabs
    compute += max(_pad_tile(h_in, w_out), _pad_tile(h_out, w_out)) * 4         # f32 accumulators
    return dma + compute


def _choose_channel_batch(nc: int, per_ch_bytes: int) -> int:
    budget = 24 * 1024 * 1024          # conservative: leaves headroom inside v7x's 64 MiB VMEM
    b_cap = max(1, budget // max(per_ch_bytes, 1))
    if nc >= 2:
        b_cap = min(b_cap, nc // 2)    # keep the parallel grid >= 2 (both v7x TensorCores)
    best = 1
    for cand in range(1, int(min(b_cap, nc)) + 1):
        if nc % cand == 0:
            best = cand
    return best


# ----------------------------------------------------------------------------
# Pallas kernel
# ----------------------------------------------------------------------------
def _resize_kernel(wh_ref, x_ref, wwt_ref, o_ref, *,
                   width_first: bool, round_int: bool, out_lo: float, out_hi: float):
    # wh_ref:  (H_out, H_in)       bf16
    # x_ref:   (B, H_in, W_in)     native image dtype
    # wwt_ref: (W_in, W_out)       bf16  (pre-transposed in the wrapper)
    # o_ref:   (B, H_out, W_out)   native image dtype
    b_blk, h_in, w_in = x_ref.shape

    wh = wh_ref[...]
    wwt = wwt_ref[...]
    x = x_ref[...].astype(jnp.bfloat16)

    def _store(b, acc_f32):
        if round_int:
            acc_f32 = jnp.clip(jnp.round(acc_f32), out_lo, out_hi)
        o_ref[b] = acc_f32.astype(o_ref.dtype)

    if width_first:
        # One big MXU matmul over the flattened (B*H_in, W_in) slab, then per-channel
        # height matmuls.
        t = jnp.dot(x.reshape(b_blk * h_in, w_in), wwt,
                    preferred_element_type=jnp.float32).astype(jnp.bfloat16)   # (B*H_in, W_out)
        for b in range(b_blk):
            _store(b, jnp.dot(wh, t[b * h_in:(b + 1) * h_in, :],
                              preferred_element_type=jnp.float32))             # (H_out, W_out)
    else:
        # Shrink H first (fewer FLOPs / smaller intermediate for this shape).
        for b in range(b_blk):
            t_b = jnp.dot(wh, x[b],
                          preferred_element_type=jnp.float32).astype(jnp.bfloat16)  # (H_out, W_in)
            _store(b, jnp.dot(t_b, wwt, preferred_element_type=jnp.float32))        # (H_out, W_out)


# ----------------------------------------------------------------------------
# Wrappers
# ----------------------------------------------------------------------------
@functools.partial(jax.jit, static_argnames=("size",))
def resize_image(image: jnp.ndarray, size) -> jnp.ndarray:
    """Bilinear resize of an NCHW image to (size[0], size[1]) in its native dtype."""
    n, c, h_in, w_in = image.shape
    h_out, w_out = int(size[0]), int(size[1])
    nc = n * c

    # bf16 interpolation weights (accumulation stays in f32 on the MXU).
    wh = _interp_matrix(h_out, h_in).astype(jnp.bfloat16)        # (H_out, H_in)
    wwt = _interp_matrix(w_out, w_in).T.astype(jnp.bfloat16)     # (W_in, W_out), pre-transposed

    itemsize = jnp.dtype(image.dtype).itemsize
    per_ch = _per_channel_vmem_bytes(h_in, w_in, h_out, w_out, itemsize)
    b_blk = _choose_channel_batch(nc, per_ch)
    grid_len = nc // b_blk

    # Static matmul-order choice: do the cheaper contraction first.
    cost_wfirst = h_in * w_in * w_out + h_in * w_out * h_out
    cost_hfirst = h_in * w_in * h_out + h_out * w_in * w_out
    width_first = cost_wfirst <= cost_hfirst

    round_int = bool(jnp.issubdtype(image.dtype, jnp.integer))
    if round_int:
        info = jnp.iinfo(image.dtype)
        out_lo, out_hi = float(info.min), float(info.max)
    else:
        out_lo = out_hi = 0.0

    kernel = functools.partial(_resize_kernel, width_first=width_first,
                               round_int=round_int, out_lo=out_lo, out_hi=out_hi)

    weights_bytes = (_pad_tile(h_out, h_in) + _pad_tile(w_in, w_out)) * 2
    vmem_est = b_blk * per_ch + weights_bytes
    vmem_limit = int(min(max(2 * vmem_est, 32 * 1024 * 1024), 56 * 1024 * 1024))

    x = image.reshape(nc, h_in, w_in)   # native dtype — no f32 round-trip through HBM

    out = pl.pallas_call(
        kernel,
        out_shape=jax.ShapeDtypeStruct((nc, h_out, w_out), image.dtype),
        grid_spec=pltpu.PrefetchScalarGridSpec(
            num_scalar_prefetch=0,
            grid=(grid_len,),
            in_specs=[
                pl.BlockSpec((h_out, h_in), lambda i: (0, 0)),
                pl.BlockSpec((b_blk, h_in, w_in), lambda i: (i, 0, 0)),
                pl.BlockSpec((w_in, w_out), lambda i: (0, 0)),
            ],
            out_specs=pl.BlockSpec((b_blk, h_out, w_out), lambda i: (i, 0, 0)),
        ),
        compiler_params=pltpu.CompilerParams(
            dimension_semantics=("parallel",),
            vmem_limit_bytes=vmem_limit),
    )(wh, x, wwt)

    return out.reshape(n, c, h_out, w_out)


def scale_boxes(boxes: jnp.ndarray, size, orig_hw) -> jnp.ndarray:
    """boxes: (N, 4) xyxy. Scales x by size[1]/W and y by size[0]/H.

    Tiny (N, 4) elementwise op — plain jnp (fused by XLA); a pallas_call here is
    pure launch/padding overhead.
    """
    h_in, w_in = orig_hw
    scale_w = size[1] / w_in
    scale_h = size[0] / h_in
    scale = jnp.array([scale_w, scale_h, scale_w, scale_h], dtype=jnp.float32)
    out = boxes.astype(jnp.float32) * scale
    if jnp.issubdtype(boxes.dtype, jnp.floating):
        out = out.astype(boxes.dtype)
    # integer box dtypes intentionally stay float32 to avoid truncating scaled coords
    return out


def resize_forward(image, target, size):
    """Mirrors Resize.forward(image, target)."""
    h_in, w_in = image.shape[-2], image.shape[-1]
    image_out = resize_image(image, size)
    if target is not None:
        target = dict(target)
        target["boxes"] = scale_boxes(target["boxes"], size, (h_in, w_in))
    return image_out, target


# ----------------------------------------------------------------------------
# Demo / smoke test
# ----------------------------------------------------------------------------
if __name__ == "__main__":
    key = jax.random.PRNGKey(0)
    k_img, k_box = jax.random.split(key)

    # small NCHW image, resized to a non-square target size
    image = jax.random.normal(k_img, (2, 4, 16, 16), dtype=jnp.float32)
    boxes = jax.random.uniform(k_box, (3, 4), dtype=jnp.float32,
                               minval=0.0, maxval=16.0)
    target = {"boxes": boxes}

    size = (8, 12)  # (height, width)
    image_out, target_out = resize_forward(image, target, size)
    jax.block_until_ready(image_out)
    jax.block_until_ready(target_out["boxes"])

    assert image_out.shape == (2, 4, 8, 12)
    assert image_out.dtype == image.dtype
    assert target_out["boxes"].shape == (3, 4)

    # semantic sanity check: interpolation weights are a partition of unity,
    # so resizing a constant image must return (approximately) that constant.
    const_img = jnp.full((2, 4, 16, 16), 3.0, dtype=jnp.float32)
    const_out, _ = resize_forward(const_img, None, size)
    jax.block_until_ready(const_out)
    assert bool(jnp.allclose(const_out, 3.0, atol=0.1))

    print("KERNEL_OK")
</pallas_src>

<mosaic_0001>
module attributes {stable_mosaic.version = 11 : i64} {
  func.func @_resize_kernel(%arg0: i32, %arg1: memref<8x16xbf16, #tpu.memory_space<vmem>>, %arg2: memref<4x16x16xf32, #tpu.memory_space<vmem>>, %arg3: memref<16x12xbf16, #tpu.memory_space<vmem>>, %arg4: memref<4x8x12xf32, #tpu.memory_space<vmem>>) attributes {dimension_semantics = [#tpu.dimension_semantics<parallel>], iteration_bounds = array<i64: 2>, scalar_prefetch = 0 : i64, scratch_operands = 0 : i64, tpu.core_type = #tpu.core_type<tc>, window_params = [{pipeline_mode = #tpu.pipeline_mode<synchronous>, transform_indices = @transform_0, window_bounds = array<i64: 8, 16>}, {transform_indices = @transform_1, window_bounds = array<i64: 4, 16, 16>}, {pipeline_mode = #tpu.pipeline_mode<synchronous>, transform_indices = @transform_2, window_bounds = array<i64: 16, 12>}, {transform_indices = @transform_3, window_bounds = array<i64: 4, 8, 12>}]} {
    %c0 = arith.constant 0 : index
    %c0_0 = arith.constant 0 : index
    %0 = vector.load %arg1[%c0, %c0_0] : memref<8x16xbf16, #tpu.memory_space<vmem>>, vector<8x16xbf16>
    %c0_1 = arith.constant 0 : index
    %c0_2 = arith.constant 0 : index
    %1 = vector.load %arg3[%c0_1, %c0_2] : memref<16x12xbf16, #tpu.memory_space<vmem>>, vector<16x12xbf16>
    %c0_3 = arith.constant 0 : index
    %c0_4 = arith.constant 0 : index
    %c0_5 = arith.constant 0 : index
    %2 = vector.load %arg2[%c0_3, %c0_4, %c0_5] : memref<4x16x16xf32, #tpu.memory_space<vmem>>, vector<4x16x16xf32>
    %3 = arith.truncf %2 : vector<4x16x16xf32> to vector<4x16x16xbf16>
    %4 = vector.extract_strided_slice %3 {offsets = [0, 0, 0], sizes = [1, 16, 16], strides = [1, 1, 1]} : vector<4x16x16xbf16> to vector<1x16x16xbf16>
    %5 = vector.shape_cast %4 : vector<1x16x16xbf16> to vector<16x16xbf16>
    %cst = arith.constant dense<0.000000e+00> : vector<8x16xf32>
    %6 = tpu.matmul %0, %5, %cst {dimension_numbers = #tpu.dot_dimension_numbers<[1], [0], [0], [1], [0, 0, 1, 1], [], []>} : vector<8x16xbf16>, vector<16x16xbf16>, vector<8x16xf32> -> vector<8x16xf32>
    %7 = arith.truncf %6 : vector<8x16xf32> to vector<8x16xbf16>
    %cst_6 = arith.constant dense<0.000000e+00> : vector<8x12xf32>
    %8 = tpu.matmul %7, %1, %cst_6 {dimension_numbers = #tpu.dot_dimension_numbers<[1], [0], [0], [1], [0, 0, 1, 1], [], []>} : vector<8x16xbf16>, vector<16x12xbf16>, vector<8x12xf32> -> vector<8x12xf32>
    %c0_7 = arith.constant 0 : index
    %c0_8 = arith.constant 0 : index
    %c0_9 = arith.constant 0 : index
    %9 = vector.load %arg4[%c0_7, %c0_8, %c0_9] : memref<4x8x12xf32, #tpu.memory_space<vmem>>, vector<1x8x12xf32>
    %10 = vector.shape_cast %9 : vector<1x8x12xf32> to vector<8x12xf32>
    %11 = vector.shape_cast %8 : vector<8x12xf32> to vector<1x8x12xf32>
    tpu.vector_store %arg4[%c0_7, %c0_8, %c0_9], %11 {strides = array<i32>} : memref<4x8x12xf32, #tpu.memory_space<vmem>>, vector<1x8x12xf32>,
    %12 = vector.extract_strided_slice %3 {offsets = [1, 0, 0], sizes = [1, 16, 16], strides = [1, 1, 1]} : vector<4x16x16xbf16> to vector<1x16x16xbf16>
    %13 = vector.shape_cast %12 : vector<1x16x16xbf16> to vector<16x16xbf16>
    %cst_10 = arith.constant dense<0.000000e+00> : vector<8x16xf32>
    %14 = tpu.matmul %0, %13, %cst_10 {dimension_numbers = #tpu.dot_dimension_numbers<[1], [0], [0], [1], [0, 0, 1, 1], [], []>} : vector<8x16xbf16>, vector<16x16xbf16>, vector<8x16xf32> -> vector<8x16xf32>
    %15 = arith.truncf %14 : vector<8x16xf32> to vector<8x16xbf16>
    %cst_11 = arith.constant dense<0.000000e+00> : vector<8x12xf32>
    %16 = tpu.matmul %15, %1, %cst_11 {dimension_numbers = #tpu.dot_dimension_numbers<[1], [0], [0], [1], [0, 0, 1, 1], [], []>} : vector<8x16xbf16>, vector<16x12xbf16>, vector<8x12xf32> -> vector<8x12xf32>
    %c1 = arith.constant 1 : index
    %c0_12 = arith.constant 0 : index
    %c0_13 = arith.constant 0 : index
    %17 = vector.load %arg4[%c1, %c0_12, %c0_13] : memref<4x8x12xf32, #tpu.memory_space<vmem>>, vector<1x8x12xf32>
    %18 = vector.shape_cast %17 : vector<1x8x12xf32> to vector<8x12xf32>
    %19 = vector.shape_cast %16 : vector<8x12xf32> to vector<1x8x12xf32>
    tpu.vector_store %arg4[%c1, %c0_12, %c0_13], %19 {strides = array<i32>} : memref<4x8x12xf32, #tpu.memory_space<vmem>>, vector<1x8x12xf32>,
    %20 = vector.extract_strided_slice %3 {offsets = [2, 0, 0], sizes = [1, 16, 16], strides = [1, 1, 1]} : vector<4x16x16xbf16> to vector<1x16x16xbf16>
    %21 = vector.shape_cast %20 : vector<1x16x16xbf16> to vector<16x16xbf16>
    %cst_14 = arith.constant dense<0.000000e+00> : vector<8x16xf32>
    %22 = tpu.matmul %0, %21, %cst_14 {dimension_numbers = #tpu.dot_dimension_numbers<[1], [0], [0], [1], [0, 0, 1, 1], [], []>} : vector<8x16xbf16>, vector<16x16xbf16>, vector<8x16xf32> -> vector<8x16xf32>
    %23 = arith.truncf %22 : vector<8x16xf32> to vector<8x16xbf16>
    %cst_15 = arith.constant dense<0.000000e+00> : vector<8x12xf32>
    %24 = tpu.matmul %23, %1, %cst_15 {dimension_numbers = #tpu.dot_dimension_numbers<[1], [0], [0], [1], [0, 0, 1, 1], [], []>} : vector<8x16xbf16>, vector<16x12xbf16>, vector<8x12xf32> -> vector<8x12xf32>
    %c2 = arith.constant 2 : index
    %c0_16 = arith.constant 0 : index
    %c0_17 = arith.constant 0 : index
    %25 = vector.load %arg4[%c2, %c0_16, %c0_17] : memref<4x8x12xf32, #tpu.memory_space<vmem>>, vector<1x8x12xf32>
    %26 = vector.shape_cast %25 : vector<1x8x12xf32> to vector<8x12xf32>
    %27 = vector.shape_cast %24 : vector<8x12xf32> to vector<1x8x12xf32>
    tpu.vector_store %arg4[%c2, %c0_16, %c0_17], %27 {strides = array<i32>} : memref<4x8x12xf32, #tpu.memory_space<vmem>>, vector<1x8x12xf32>,
    %28 = vector.extract_strided_slice %3 {offsets = [3, 0, 0], sizes = [1, 16, 16], strides = [1, 1, 1]} : vector<4x16x16xbf16> to vector<1x16x16xbf16>
    %29 = vector.shape_cast %28 : vector<1x16x16xbf16> to vector<16x16xbf16>
    %cst_18 = arith.constant dense<0.000000e+00> : vector<8x16xf32>
    %30 = tpu.matmul %0, %29, %cst_18 {dimension_numbers = #tpu.dot_dimension_numbers<[1], [0], [0], [1], [0, 0, 1, 1], [], []>} : vector<8x16xbf16>, vector<16x16xbf16>, vector<8x16xf32> -> vector<8x16xf32>
    %31 = arith.truncf %30 : vector<8x16xf32> to vector<8x16xbf16>
    %cst_19 = arith.constant dense<0.000000e+00> : vector<8x12xf32>
    %32 = tpu.matmul %31, %1, %cst_19 {dimension_numbers = #tpu.dot_dimension_numbers<[1], [0], [0], [1], [0, 0, 1, 1], [], []>} : vector<8x16xbf16>, vector<16x12xbf16>, vector<8x12xf32> -> vector<8x12xf32>
    %c3 = arith.constant 3 : index
    %c0_20 = arith.constant 0 : index
    %c0_21 = arith.constant 0 : index
    %33 = vector.load %arg4[%c3, %c0_20, %c0_21] : memref<4x8x12xf32, #tpu.memory_space<vmem>>, vector<1x8x12xf32>
    %34 = vector.shape_cast %33 : vector<1x8x12xf32> to vector<8x12xf32>
    %35 = vector.shape_cast %32 : vector<8x12xf32> to vector<1x8x12xf32>
    tpu.vector_store %arg4[%c3, %c0_20, %c0_21], %35 {strides = array<i32>} : memref<4x8x12xf32, #tpu.memory_space<vmem>>, vector<1x8x12xf32>,
    return
  }
  func.func @transform_0(%arg0: i32) -> (i32, i32) {
    %c0_i32 = arith.constant 0 : i32
    %c0_i32_0 = arith.constant 0 : i32
    %c0_i32_1 = arith.constant 0 : i32
    return %c0_i32, %c0_i32_0 : i32, i32
  }
  func.func @transform_1(%arg0: i32) -> (i32, i32, i32) {
    %c0_i32 = arith.constant 0 : i32
    %c0_i32_0 = arith.constant 0 : i32
    %c0_i32_1 = arith.constant 0 : i32
    return %arg0, %c0_i32, %c0_i32_0 : i32, i32, i32
  }
  func.func @transform_2(%arg0: i32) -> (i32, i32) {
    %c0_i32 = arith.constant 0 : i32
    %c0_i32_0 = arith.constant 0 : i32
    %c0_i32_1 = arith.constant 0 : i32
    return %c0_i32, %c0_i32_0 : i32, i32
  }
  func.func @transform_3(%arg0: i32) -> (i32, i32, i32) {
    %c0_i32 = arith.constant 0 : i32
    %c0_i32_0 = arith.constant 0 : i32
    %c0_i32_1 = arith.constant 0 : i32
    return %arg0, %c0_i32, %c0_i32_0 : i32, i32, i32
  }
}

</mosaic_0001>

<llo_original>
// kernel: resize_image.1
$region0: #{resize_image.1}
  #allocation0 [shape = 'u32[]', space=smem, size = 0x4, offset = 0x4, fixed_abs, tag = 'smem constant byte address 0x4 - core index']
  #allocation1 [shape = 'u32[144,128]{1,0:T(1,128)}', space=vmem, size = 0x12000, scoped, tag = 'internal scratch']
  %s0 = inlined_call_operand.vmem [shape: bf16[8,16], index: 0, kind: input, shape index: {}]
  %s1 = inlined_call_operand.hbm [shape: f32[8,16,16], index: 1, kind: input, shape index: {}]
  %s2 = inlined_call_operand.vmem [shape: bf16[16,12], index: 2, kind: input, shape index: {}]
  %s3 = inlined_call_operand.hbm [shape: f32[8,8,12], index: 3, kind: output, shape index: {}]
  %s4 = sld [smem:[#allocation0]]
  $region49: #{resize_image.1} parent=0
    _
  %s6 = ssub.s32 1, %s4
  %s7 = scalar_select 0, %s6, %s4
  $region1: #{resize_image.1} parent=0
    #allocation2 [shape = 'u8[65536]{0}', space=vmem, size = 0x10000, scoped, tag = 'input window, operand 1']
    #allocation3 [shape = 's32[2]{0}', space=sflag, size = 0x8, scoped, tag = 'scoped memory for resize_image.1']
    #allocation4 [shape = 's32[2]{0}', space=sflag, size = 0x8, scoped, tag = 'scoped memory for resize_image.1']
    #allocation5 [shape = 'u8[32768]{0}', space=vmem, size = 0x8000, scoped, tag = 'output window, operand 0']
    %8 = vsyncpa [#allocation3], 0
    %s9 = scalar_lea.sflag [#allocation3], 1
    %10 = vsyncpa %s9, 0
    %11 = vsyncpa [#allocation4], 0
    %s12 = scalar_lea.sflag [#allocation4], 1
    %13 = vsyncpa %s12, 0
    loop: start=0, step=1, limit=4
    $region2: #{resize_image.1} parent=1 // loop_pre_header
      _
    $region3: #{resize_image.1} parent=1 // loop_header
      %s15 = sphi 0, %s19
      %p16 = scmp.ge.s32.totalorder %s15, 4
      %s23 = sphi 0, %s23
      %s25 = sphi 0, %s23
      %s26 = sphi 0, %s25
      %s40 = sphi 0, %s26
      %s46 = sphi 0, %s48
      %s49 = sphi 0, %s46
      %s50 = sphi 0, %s49
      %s66 = sphi 0, %s50
      %s70 = sphi 0, %s70
      %s72 = sphi 0, %s70
      %s73 = sphi 0, %s72
      %s87 = sphi 0, %s73
      %s93 = sphi 0, %s95
      %s96 = sphi 0, %s93
      %s97 = sphi 0, %s96
      %s113 = sphi 0, %s97
    $region4: #{resize_image.1} parent=1 // loop_header_branch
      %18 = sbr.rel (%p16) target = $region8
    $region5: #{resize_image.1} parent=1 // loop_body
      %s20 = ssub.s32 %s15, 1
      %s21 = ssub.s32 %s15, 2
      %s22 = sadd.s32 %s15, 1
      %s24 = sadd.s32 %s23, 1
      %p27 = scmp.eq.s32.totalorder %s15, 1
      %p28 = scmp.ne.s32.totalorder %s23, %s25
      %p29 = scmp.eq.s32.totalorder %s15, 0
      %p30 = por %p28, %p29
      %p31 = scmp.ne.s32.totalorder %s23, %s25
      %p32 = scmp.eq.s32.totalorder %s20, 1
      %p33 = por %p31, %p32
      %p34 = scmp.ne.s32.totalorder %s25, %s26
      %p35 = scmp.eq.s32.totalorder %s20, 0
      %p36 = por %p34, %p35
      %p37 = scmp.ne.s32.totalorder %s25, %s26
      %p38 = scmp.eq.s32.totalorder %s21, 1
      %p39 = por %p37, %p38
      %p41 = scmp.ne.s32.totalorder %s26, %s40
      %p42 = scmp.eq.s32.totalorder %s21, 0
      %p43 = por %p41, %p42
      %s44 = ssub.s32 %s15, %s22
      %p45 = scmp.eq.s32.totalorder %s44, 0
      %s47 = sadd.s32 %s46, 1
      %s48 = scalar_select %p45, %s46, %s47
      %p51 = pneg %p45
      %p52 = scmp.eq.s32.totalorder %s15, 1
      %p53 = por %p51, %p52
      %p54 = scmp.ne.s32.totalorder %s46, %s49
      %p55 = scmp.eq.s32.totalorder %s15, 0
      %p56 = por %p54, %p55
      %p57 = scmp.ne.s32.totalorder %s46, %s49
      %p58 = scmp.eq.s32.totalorder %s20, 1
      %p59 = por %p57, %p58
      %p60 = scmp.ne.s32.totalorder %s49, %s50
      %p61 = scmp.eq.s32.totalorder %s20, 0
      %p62 = por %p60, %p61
      %p63 = scmp.ne.s32.totalorder %s49, %s50
      %p64 = scmp.eq.s32.totalorder %s21, 1
      %p65 = por %p63, %p64
      %p67 = scmp.ne.s32.totalorder %s50, %s66
      %p68 = scmp.eq.s32.totalorder %s21, 0
      %p69 = por %p67, %p68
      %s71 = sadd.s32 %s70, 1
      %p74 = scmp.eq.s32.totalorder %s15, 1
      %p75 = scmp.ne.s32.totalorder %s70, %s72
      %p76 = scmp.eq.s32.totalorder %s15, 0
      %p77 = por %p75, %p76
      %p78 = scmp.ne.s32.totalorder %s70, %s72
      %p79 = scmp.eq.s32.totalorder %s20, 1
      %p80 = por %p78, %p79
      %p81 = scmp.ne.s32.totalorder %s72, %s73
      %p82 = scmp.eq.s32.totalorder %s20, 0
      %p83 = por %p81, %p82
      %p84 = scmp.ne.s32.totalorder %s72, %s73
      %p85 = scmp.eq.s32.totalorder %s21, 1
      %p86 = por %p84, %p85
      %p88 = scmp.ne.s32.totalorder %s73, %s87
      %p89 = scmp.eq.s32.totalorder %s21, 0
      %p90 = por %p88, %p89
      %s91 = ssub.s32 %s15, %s22
      %p92 = scmp.eq.s32.totalorder %s91, 0
      %s94 = sadd.s32 %s93, 1
      %s95 = scalar_select %p92, %s93, %s94
      %p98 = pneg %p92
      %p99 = scmp.eq.s32.totalorder %s15, 1
      %p100 = por %p98, %p99
      %p101 = scmp.ne.s32.totalorder %s93, %s96
      %p102 = scmp.eq.s32.totalorder %s15, 0
      %p103 = por %p101, %p102
      %p104 = scmp.ne.s32.totalorder %s93, %s96
      %p105 = scmp.eq.s32.totalorder %s20, 1
      %p106 = por %p104, %p105
      %p107 = scmp.ne.s32.totalorder %s96, %s97
      %p108 = scmp.eq.s32.totalorder %s20, 0
      %p109 = por %p107, %p108
      %p110 = scmp.ne.s32.totalorder %s96, %s97
      %p111 = scmp.eq.s32.totalorder %s21, 1
      %p112 = por %p110, %p111
      %p114 = scmp.ne.s32.totalorder %s97, %s113
      %p115 = scmp.eq.s32.totalorder %s21, 0
      %p116 = por %p114, %p115
      %p117 = scmp.le.s32.totalorder 1, %s15
      %p118 = scmp.lt.s32.totalorder %s15, 3
      %p119 = pnand %p117, %p118
      %p120 = pneg %p119
      // Predicated region
      $region9: #{resize_image.1} parent=5 // pred_check
        _
      $region10: #{resize_image.1} parent=5 // pred_check_branch
        %122 = sbr.rel (%p119) target = $region12
      $region11: #{resize_image.1} parent=5 // pred_region
        %s123 = ssub.s32 %s15, 1
        // Predicated region
        $region13: #{resize_image.1} parent=11 // pred_check
          %p124 = pneg %p36
        $region14: #{resize_image.1} parent=11 // pred_check_branch
          %126 = sbr.rel (%p124) target = $region16
        $region15: #{resize_image.1} parent=11 // pred_region
          _
        $region16: #{resize_image.1} parent=11 // pred_fallthru
          _
        // Predicated region
        $region17: #{resize_image.1} parent=11 // pred_check
          %p127 = pneg %p83
        $region18: #{resize_image.1} parent=11 // pred_check_branch
          %129 = sbr.rel (%p127) target = $region20
        $region19: #{resize_image.1} parent=11 // pred_region
          _
        $region20: #{resize_image.1} parent=11 // pred_fallthru
          _
      $region12: #{resize_image.1} parent=5 // pred_fallthru
        _
      %p130 = scmp.lt.s32.totalorder %s15, 2
      // Predicated region
      $region21: #{resize_image.1} parent=5 // pred_check
        %p131 = pneg %p130
      $region22: #{resize_image.1} parent=5 // pred_check_branch
        %133 = sbr.rel (%p131) target = $region24
      $region23: #{resize_image.1} parent=5 // pred_region
        // Predicated region
        $region25: #{resize_image.1} parent=23 // pred_check
          %p134 = pneg %p56
        $region26: #{resize_image.1} parent=23 // pred_check_branch
          %136 = sbr.rel (%p134) target = $region28
        $region27: #{resize_image.1} parent=23 // pred_region
          %s137 = sand.u32 %s46, 1
          %s138 = scalar_lea.sflag [#allocation3], %s137
          %s139 = sand.u32 %s46, 1
          %s140 = smul.addr %s139, 64
          %s141 = scalar_lea.vmem [#allocation2], %s140
          %s142 = smul.u32 4, %s15
          %s144 = ssub.s32 1024, 1024
          %145 = vsyncadd %s138, %s144
          %s146 = smul.addr %s142, 2
          %s147 = smul.addr %s146, 128
          %s148 = scalar_lea.hbm %s1, %s147
          %s149 = sshll.u32 %s141, 4
          %s150 = int_to_ptr.vmem [resolvable:$true] %s149
          %155 = dma.hbm_to_vmem [thread:$0]  %s148, 1024, %s150, %s138, 128, 128, 8
        $region28: #{resize_image.1} parent=23 // pred_fallthru
          _
      $region24: #{resize_image.1} parent=5 // pred_fallthru
        _
      %p156 = scmp.le.s32.totalorder 1, %s15
      %p157 = scmp.lt.s32.totalorder %s15, 3
      %p158 = pnand %p156, %p157
      %p159 = pneg %p158
      // Predicated region
      $region29: #{resize_image.1} parent=5 // pred_check
        _
      $region30: #{resize_image.1} parent=5 // pred_check_branch
        %161 = sbr.rel (%p158) target = $region32
      $region31: #{resize_image.1} parent=5 // pred_region
        %s162 = ssub.s32 %s15, 1
        %s163 = sand.u32 %s49, 1
        %s164 = scalar_lea.sflag [#allocation3], %s163
        %s165 = sand.u32 %s49, 1
        %s166 = smul.addr %s165, 64
        %s167 = scalar_lea.vmem [#allocation2], %s166
        // Predicated region
        $region33: #{resize_image.1} parent=31 // pred_check
          %p168 = pneg %p62
        $region34: #{resize_image.1} parent=31 // pred_check_branch
          %170 = sbr.rel (%p168) target = $region36
        $region35: #{resize_image.1} parent=31 // pred_region
          %171 = dma.done %s164, 1024
        $region36: #{resize_image.1} parent=31 // pred_fallthru
          _
        %p172 = pneg %p36
        %p173 = pneg %p33
        %s174 = sand.u32 %s49, 1
        %s175 = scalar_lea.sflag [#allocation3], %s174
        %s176 = sand.u32 %s49, 1
        %s177 = smul.addr %s176, 64
        %s178 = scalar_lea.vmem [#allocation2], %s177
        %p179 = pneg %p62
        %p180 = pneg %p59
        %p181 = pneg %p83
        %p182 = pneg %p80
        %p183 = pneg %p109
        %p184 = pneg %p106
        %s185 = sand.u32 %s96, 1
        %s186 = scalar_lea.sflag [#allocation4], %s185
        %s187 = sand.u32 %s96, 1
        %s188 = smul.addr %s187, 32
        %s189 = scalar_lea.vmem [#allocation5], %s188
        %s190 = smul.u32 4, %s20
        %s191 = smul.u32 4, %s20
        %v193 = vld [vmem:[%s0] sm:$0xf]
        %v194 = vld [vmem:[%s2] sm:$0xf]
        %v195 = vld [vmem:[%s2 + $0x4] sm:$0xf]
        %v196 = vld [vmem:[%s167] sm:$0xff]
        %v197 = vld [vmem:[%s167 + $0x8] sm:$0xff]
        %v198 = vld [vmem:[%s167 + $0x10] sm:$0xff]
        %v199 = vld [vmem:[%s167 + $0x18] sm:$0xff]
        %v200 = vld [vmem:[%s167 + $0x20] sm:$0xff]
        %v201 = vld [vmem:[%s167 + $0x28] sm:$0xff]
        %v202 = vld [vmem:[%s167 + $0x30] sm:$0xff]
        %v203 = vld [vmem:[%s167 + $0x38] sm:$0xff]
        %v204 = vpack.c.bf16 %v197, %v196
        %v205 = vpack.c.bf16 %v199, %v198
        %v206 = vpack.c.bf16 %v201, %v200
        %v207 = vpack.c.bf16 %v203, %v202
        %vm208 = vcmask 130048
        %v210 = vsel %vm208, %v193, 0
        %212 = vmatprep.subr.bf16.mxu0 0
        %213 = vmatpush1.bf16.msra.mxu0 %v204
        %214 = vmatprep.subr.bf16.mxu0 0
        %215 = vmatpush1.bf16.msra.mxu0 0
        %216 = vmatprep.subr.bf16.mxu0 0
        %217 = vmatpush1.bf16.msra.mxu0 0
        %218 = vmatprep.subr.bf16.mxu0 0
        %219 = vmatpush1.bf16.msra.mxu0 0
        %220 = vmatprep.subr.bf16.mxu0 0
        %221 = vmatpush1.bf16.msra.mxu0 0
        %222 = vmatprep.subr.bf16.mxu0 0
        %223 = vmatpush1.bf16.msra.mxu0 0
        %224 = vmatprep.subr.bf16.mxu0 0
        %225 = vmatpush1.bf16.msra.mxu0 0
        %226 = vmatprep.subr.bf16.mxu0 0
        %227 = vmatpush1.bf16.msra.mxu0 0
        %228 = vmatprep.subr.bf16.mxu0 0
        %229 = vmatpush1.bf16.msra.mxu0 0
        %230 = vmatprep.subr.bf16.mxu0 0
        %231 = vmatpush1.bf16.msra.mxu0 0
        %232 = vmatprep.subr.bf16.mxu0 0
        %233 = vmatpush1.bf16.msra.mxu0 0
        %234 = vmatprep.subr.bf16.mxu0 0
        %235 = vmatpush1.bf16.msra.mxu0 0
        %236 = vmatprep.subr.bf16.mxu0 0
        %237 = vmatpush1.bf16.msra.mxu0 0
        %238 = vmatprep.subr.bf16.mxu0 0
        %239 = vmatpush1.bf16.msra.mxu0 0
        %240 = vmatprep.subr.bf16.mxu0 0
        %241 = vmatpush1.bf16.msra.mxu0 0
        %242 = vmatprep.subr.bf16.mxu0 0
        %243 = vmatpush1.bf16.msra.mxu0 0
        %244 = vmatprep.mubr.bf16.mxu0 0
        %245 = vmatmul.mubr.bf16.gmra.mrb[0].mxu0 %v210
        %v246 = vpop.f32.mrb[0].mxu0
        %v247 = vadd.f32 0.0, %v246
        %v248 = vpop.f32.mrb[0].mxu0
        %v249 = vpop.f32.mrb[0].mxu0
        %v250 = vpop.f32.mrb[0].mxu0
        %251 = vdwg.mxu0
        %v252 = vpack.c.bf16 %v247, %v247
        %v255 = vunpack.c.l.b16 %v194
        %v256 = vunpack.c.l.b16 %v195
        %v257 = vpack.c.b16 %v256, %v255
        %v260 = vsel %vm208, %v252, 0
        %262 = vmatprep.subr.bf16.mxu0 0
        %263 = vmatpush1.bf16.msra.mxu0 %v257
        %264 = vmatprep.subr.bf16.mxu0 0
        %265 = vmatpush1.bf16.msra.mxu0 0
        %266 = vmatprep.subr.bf16.mxu0 0
        %267 = vmatpush1.bf16.msra.mxu0 0
        %268 = vmatprep.subr.bf16.mxu0 0
        %269 = vmatpush1.bf16.msra.mxu0 0
        %270 = vmatprep.subr.bf16.mxu0 0
        %271 = vmatpush1.bf16.msra.mxu0 0
        %272 = vmatprep.subr.bf16.mxu0 0
        %273 = vmatpush1.bf16.msra.mxu0 0
        %274 = vmatprep.subr.bf16.mxu0 0
        %275 = vmatpush1.bf16.msra.mxu0 0
        %276 = vmatprep.subr.bf16.mxu0 0
        %277 = vmatpush1.bf16.msra.mxu0 0
        %278 = vmatprep.subr.bf16.mxu0 0
        %279 = vmatpush1.bf16.msra.mxu0 0
        %280 = vmatprep.subr.bf16.mxu0 0
        %281 = vmatpush1.bf16.msra.mxu0 0
        %282 = vmatprep.subr.bf16.mxu0 0
        %283 = vmatpush1.bf16.msra.mxu0 0
        %284 = vmatprep.subr.bf16.mxu0 0
        %285 = vmatpush1.bf16.msra.mxu0 0
        %286 = vmatprep.subr.bf16.mxu0 0
        %287 = vmatpush1.bf16.msra.mxu0 0
        %288 = vmatprep.subr.bf16.mxu0 0
        %289 = vmatpush1.bf16.msra.mxu0 0
        %290 = vmatprep.subr.bf16.mxu0 0
        %291 = vmatpush1.bf16.msra.mxu0 0
        %292 = vmatprep.subr.bf16.mxu0 0
        %293 = vmatpush1.bf16.msra.mxu0 0
        %294 = vmatprep.mubr.bf16.mxu0 0
        %295 = vmatmul.mubr.bf16.gmra.mrb[0].mxu0 %v260
        %v296 = vpop.f32.mrb[0].mxu0
        %v297 = vadd.f32 0.0, %v296
        %v298 = vpop.f32.mrb[0].mxu0
        %v299 = vpop.f32.mrb[0].mxu0
        %v300 = vpop.f32.mrb[0].mxu0
        %301 = vdwg.mxu0
        %vm302 = vcmask 97280
        %303 = vst.msk [vmem:[%s189] sm:$0xff] %vm302, %v297
        %304 = vmatprep.subr.bf16.mxu0 0
        %305 = vmatpush1.bf16.msra.mxu0 %v205
        %306 = vmatprep.subr.bf16.mxu0 0
        %307 = vmatpush1.bf16.msra.mxu0 0
        %308 = vmatprep.subr.bf16.mxu0 0
        %309 = vmatpush1.bf16.msra.mxu0 0
        %310 = vmatprep.subr.bf16.mxu0 0
        %311 = vmatpush1.bf16.msra.mxu0 0
        %312 = vmatprep.subr.bf16.mxu0 0
        %313 = vmatpush1.bf16.msra.mxu0 0
        %314 = vmatprep.subr.bf16.mxu0 0
        %315 = vmatpush1.bf16.msra.mxu0 0
        %316 = vmatprep.subr.bf16.mxu0 0
        %317 = vmatpush1.bf16.msra.mxu0 0
        %318 = vmatprep.subr.bf16.mxu0 0
        %319 = vmatpush1.bf16.msra.mxu0 0
        %320 = vmatprep.subr.bf16.mxu0 0
        %321 = vmatpush1.bf16.msra.mxu0 0
        %322 = vmatprep.subr.bf16.mxu0 0
        %323 = vmatpush1.bf16.msra.mxu0 0
        %324 = vmatprep.subr.bf16.mxu0 0
        %325 = vmatpush1.bf16.msra.mxu0 0
        %326 = vmatprep.subr.bf16.mxu0 0
        %327 = vmatpush1.bf16.msra.mxu0 0
        %328 = vmatprep.subr.bf16.mxu0 0
        %329 = vmatpush1.bf16.msra.mxu0 0
        %330 = vmatprep.subr.bf16.mxu0 0
        %331 = vmatpush1.bf16.msra.mxu0 0
        %332 = vmatprep.subr.bf16.mxu0 0
        %333 = vmatpush1.bf16.msra.mxu0 0
        %334 = vmatprep.subr.bf16.mxu0 0
        %335 = vmatpush1.bf16.msra.mxu0 0
        %336 = vmatprep.mubr.bf16.mxu0 0
        %337 = vmatmul.mubr.bf16.gmra.mrb[0].mxu0 %v210
        %v338 = vpop.f32.mrb[0].mxu0
        %v339 = vadd.f32 0.0, %v338
        %v340 = vpop.f32.mrb[0].mxu0
        %v341 = vpop.f32.mrb[0].mxu0
        %v342 = vpop.f32.mrb[0].mxu0
        %343 = vdwg.mxu0
        %v344 = vpack.c.bf16 %v339, %v339
        %v346 = vsel %vm208, %v344, 0
        %348 = vmatprep.subr.bf16.mxu0 0
        %349 = vmatpush1.bf16.msra.mxu0 %v257
        %350 = vmatprep.subr.bf16.mxu0 0
        %351 = vmatpush1.bf16.msra.mxu0 0
        %352 = vmatprep.subr.bf16.mxu0 0
        %353 = vmatpush1.bf16.msra.mxu0 0
        %354 = vmatprep.subr.bf16.mxu0 0
        %355 = vmatpush1.bf16.msra.mxu0 0
        %356 = vmatprep.subr.bf16.mxu0 0
        %357 = vmatpush1.bf16.msra.mxu0 0
        %358 = vmatprep.subr.bf16.mxu0 0
        %359 = vmatpush1.bf16.msra.mxu0 0
        %360 = vmatprep.subr.bf16.mxu0 0
        %361 = vmatpush1.bf16.msra.mxu0 0
        %362 = vmatprep.subr.bf16.mxu0 0
        %363 = vmatpush1.bf16.msra.mxu0 0
        %364 = vmatprep.subr.bf16.mxu0 0
        %365 = vmatpush1.bf16.msra.mxu0 0
        %366 = vmatprep.subr.bf16.mxu0 0
        %367 = vmatpush1.bf16.msra.mxu0 0
        %368 = vmatprep.subr.bf16.mxu0 0
        %369 = vmatpush1.bf16.msra.mxu0 0
        %370 = vmatprep.subr.bf16.mxu0 0
        %371 = vmatpush1.bf16.msra.mxu0 0
        %372 = vmatprep.subr.bf16.mxu0 0
        %373 = vmatpush1.bf16.msra.mxu0 0
        %374 = vmatprep.subr.bf16.mxu0 0
        %375 = vmatpush1.bf16.msra.mxu0 0
        %376 = vmatprep.subr.bf16.mxu0 0
        %377 = vmatpush1.bf16.msra.mxu0 0
        %378 = vmatprep.subr.bf16.mxu0 0
        %379 = vmatpush1.bf16.msra.mxu0 0
        %380 = vmatprep.mubr.bf16.mxu0 0
        %381 = vmatmul.mubr.bf16.gmra.mrb[0].mxu0 %v346
        %v382 = vpop.f32.mrb[0].mxu0
        %v383 = vadd.f32 0.0, %v382
        %v384 = vpop.f32.mrb[0].mxu0
        %v385 = vpop.f32.mrb[0].mxu0
        %v386 = vpop.f32.mrb[0].mxu0
        %387 = vdwg.mxu0
        %s388 = scalar_lea.vmem %s189, 8 [#allocation5]
        %389 = vst.msk [vmem:[%s388] sm:$0xff] %vm302, %v383
        %390 = vmatprep.subr.bf16.mxu0 0
        %391 = vmatpush1.bf16.msra.mxu0 %v206
        %392 = vmatprep.subr.bf16.mxu0 0
        %393 = vmatpush1.bf16.msra.mxu0 0
        %394 = vmatprep.subr.bf16.mxu0 0
        %395 = vmatpush1.bf16.msra.mxu0 0
        %396 = vmatprep.subr.bf16.mxu0 0
        %397 = vmatpush1.bf16.msra.mxu0 0
        %398 = vmatprep.subr.bf16.mxu0 0
        %399 = vmatpush1.bf16.msra.mxu0 0
        %400 = vmatprep.subr.bf16.mxu0 0
        %401 = vmatpush1.bf16.msra.mxu0 0
        %402 = vmatprep.subr.bf16.mxu0 0
        %403 = vmatpush1.bf16.msra.mxu0 0
        %404 = vmatprep.subr.bf16.mxu0 0
        %405 = vmatpush1.bf16.msra.mxu0 0
        %406 = vmatprep.subr.bf16.mxu0 0
        %407 = vmatpush1.bf16.msra.mxu0 0
        %408 = vmatprep.subr.bf16.mxu0 0
        %409 = vmatpush1.bf16.msra.mxu0 0
        %410 = vmatprep.subr.bf16.mxu0 0
        %411 = vmatpush1.bf16.msra.mxu0 0
        %412 = vmatprep.subr.bf16.mxu0 0
        %413 = vmatpush1.bf16.msra.mxu0 0
        %414 = vmatprep.subr.bf16.mxu0 0
        %415 = vmatpush1.bf16.msra.mxu0 0
        %416 = vmatprep.subr.bf16.mxu0 0
        %417 = vmatpush1.bf16.msra.mxu0 0
        %418 = vmatprep.subr.bf16.mxu0 0
        %419 = vmatpush1.bf16.msra.mxu0 0
        %420 = vmatprep.subr.bf16.mxu0 0
        %421 = vmatpush1.bf16.msra.mxu0 0
        %422 = vmatprep.mubr.bf16.mxu0 0
        %423 = vmatmul.mubr.bf16.gmra.mrb[0].mxu0 %v210
        %v424 = vpop.f32.mrb[0].mxu0
        %v425 = vadd.f32 0.0, %v424
        %v426 = vpop.f32.mrb[0].mxu0
        %v427 = vpop.f32.mrb[0].mxu0
        %v428 = vpop.f32.mrb[0].mxu0
        %429 = vdwg.mxu0
        %v430 = vpack.c.bf16 %v425, %v425
        %v432 = vsel %vm208, %v430, 0
        %434 = vmatprep.subr.bf16.mxu0 0
        %435 = vmatpush1.bf16.msra.mxu0 %v257
        %436 = vmatprep.subr.bf16.mxu0 0
        %437 = vmatpush1.bf16.msra.mxu0 0
        %438 = vmatprep.subr.bf16.mxu0 0
        %439 = vmatpush1.bf16.msra.mxu0 0
        %440 = vmatprep.subr.bf16.mxu0 0
        %441 = vmatpush1.bf16.msra.mxu0 0
        %442 = vmatprep.subr.bf16.mxu0 0
        %443 = vmatpush1.bf16.msra.mxu0 0
        %444 = vmatprep.subr.bf16.mxu0 0
        %445 = vmatpush1.bf16.msra.mxu0 0
        %446 = vmatprep.subr.bf16.mxu0 0
        %447 = vmatpush1.bf16.msra.mxu0 0
        %448 = vmatprep.subr.bf16.mxu0 0
        %449 = vmatpush1.bf16.msra.mxu0 0
        %450 = vmatprep.subr.bf16.mxu0 0
        %451 = vmatpush1.bf16.msra.mxu0 0
        %452 = vmatprep.subr.bf16.mxu0 0
        %453 = vmatpush1.bf16.msra.mxu0 0
        %454 = vmatprep.subr.bf16.mxu0 0
        %455 = vmatpush1.bf16.msra.mxu0 0
        %456 = vmatprep.subr.bf16.mxu0 0
        %457 = vmatpush1.bf16.msra.mxu0 0
        %458 = vmatprep.subr.bf16.mxu0 0
        %459 = vmatpush1.bf16.msra.mxu0 0
        %460 = vmatprep.subr.bf16.mxu0 0
        %461 = vmatpush1.bf16.msra.mxu0 0
        %462 = vmatprep.subr.bf16.mxu0 0
        %463 = vmatpush1.bf16.msra.mxu0 0
        %464 = vmatprep.subr.bf16.mxu0 0
        %465 = vmatpush1.bf16.msra.mxu0 0
        %466 = vmatprep.mubr.bf16.mxu0 0
        %467 = vmatmul.mubr.bf16.gmra.mrb[0].mxu0 %v432
        %v468 = vpop.f32.mrb[0].mxu0
        %v469 = vadd.f32 0.0, %v468
        %v470 = vpop.f32.mrb[0].mxu0
        %v471 = vpop.f32.mrb[0].mxu0
        %v472 = vpop.f32.mrb[0].mxu0
        %473 = vdwg.mxu0
        %s474 = scalar_lea.vmem %s189, 16 [#allocation5]
        %475 = vst.msk [vmem:[%s474] sm:$0xff] %vm302, %v469
        %476 = vmatprep.subr.bf16.mxu0 0
        %477 = vmatpush1.bf16.msra.mxu0 %v207
        %478 = vmatprep.subr.bf16.mxu0 0
        %479 = vmatpush1.bf16.msra.mxu0 0
        %480 = vmatprep.subr.bf16.mxu0 0
        %481 = vmatpush1.bf16.msra.mxu0 0
        %482 = vmatprep.subr.bf16.mxu0 0
        %483 = vmatpush1.bf16.msra.mxu0 0
        %484 = vmatprep.subr.bf16.mxu0 0
        %485 = vmatpush1.bf16.msra.mxu0 0
        %486 = vmatprep.subr.bf16.mxu0 0
        %487 = vmatpush1.bf16.msra.mxu0 0
        %488 = vmatprep.subr.bf16.mxu0 0
        %489 = vmatpush1.bf16.msra.mxu0 0
        %490 = vmatprep.subr.bf16.mxu0 0
        %491 = vmatpush1.bf16.msra.mxu0 0
        %492 = vmatprep.subr.bf16.mxu0 0
        %493 = vmatpush1.bf16.msra.mxu0 0
        %494 = vmatprep.subr.bf16.mxu0 0
        %495 = vmatpush1.bf16.msra.mxu0 0
        %496 = vmatprep.subr.bf16.mxu0 0
        %497 = vmatpush1.bf16.msra.mxu0 0
        %498 = vmatprep.subr.bf16.mxu0 0
        %499 = vmatpush1.bf16.msra.mxu0 0
        %500 = vmatprep.subr.bf16.mxu0 0
        %501 = vmatpush1.bf16.msra.mxu0 0
        %502 = vmatprep.subr.bf16.mxu0 0
        %503 = vmatpush1.bf16.msra.mxu0 0
        %504 = vmatprep.subr.bf16.mxu0 0
        %505 = vmatpush1.bf16.msra.mxu0 0
        %506 = vmatprep.subr.bf16.mxu0 0
        %507 = vmatpush1.bf16.msra.mxu0 0
        %508 = vmatprep.mubr.bf16.mxu0 0
        %509 = vmatmul.mubr.bf16.gmra.mrb[0].mxu0 %v210
        %v510 = vpop.f32.mrb[0].mxu0
        %v511 = vadd.f32 0.0, %v510
        %v512 = vpop.f32.mrb[0].mxu0
        %v513 = vpop.f32.mrb[0].mxu0
        %v514 = vpop.f32.mrb[0].mxu0
        %515 = vdwg.mxu0
        %v516 = vpack.c.bf16 %v511, %v511
        %v518 = vsel %vm208, %v516, 0
        %520 = vmatprep.subr.bf16.mxu0 0
        %521 = vmatpush1.bf16.msra.mxu0 %v257
        %522 = vmatprep.subr.bf16.mxu0 0
        %523 = vmatpush1.bf16.msra.mxu0 0
        %524 = vmatprep.subr.bf16.mxu0 0
        %525 = vmatpush1.bf16.msra.mxu0 0
        %526 = vmatprep.subr.bf16.mxu0 0
        %527 = vmatpush1.bf16.msra.mxu0 0
        %528 = vmatprep.subr.bf16.mxu0 0
        %529 = vmatpush1.bf16.msra.mxu0 0
        %530 = vmatprep.subr.bf16.mxu0 0
        %531 = vmatpush1.bf16.msra.mxu0 0
        %532 = vmatprep.subr.bf16.mxu0 0
        %533 = vmatpush1.bf16.msra.mxu0 0
        %534 = vmatprep.subr.bf16.mxu0 0
        %535 = vmatpush1.bf16.msra.mxu0 0
        %536 = vmatprep.subr.bf16.mxu0 0
        %537 = vmatpush1.bf16.msra.mxu0 0
        %538 = vmatprep.subr.bf16.mxu0 0
        %539 = vmatpush1.bf16.msra.mxu0 0
        %540 = vmatprep.subr.bf16.mxu0 0
        %541 = vmatpush1.bf16.msra.mxu0 0
        %542 = vmatprep.subr.bf16.mxu0 0
        %543 = vmatpush1.bf16.msra.mxu0 0
        %544 = vmatprep.subr.bf16.mxu0 0
        %545 = vmatpush1.bf16.msra.mxu0 0
        %546 = vmatprep.subr.bf16.mxu0 0
        %547 = vmatpush1.bf16.msra.mxu0 0
        %548 = vmatprep.subr.bf16.mxu0 0
        %549 = vmatpush1.bf16.msra.mxu0 0
        %550 = vmatprep.subr.bf16.mxu0 0
        %551 = vmatpush1.bf16.msra.mxu0 0
        %552 = vmatprep.mubr.bf16.mxu0 0
        %553 = vmatmul.mubr.bf16.gmra.mrb[0].mxu0 %v518
        %v554 = vpop.f32.mrb[0].mxu0
        %v555 = vadd.f32 0.0, %v554
        %v556 = vpop.f32.mrb[0].mxu0
        %v557 = vpop.f32.mrb[0].mxu0
        %v558 = vpop.f32.mrb[0].mxu0
        %559 = vdwg.mxu0
        %s560 = scalar_lea.vmem %s189, 24 [#allocation5]
        %561 = vst.msk [vmem:[%s560] sm:$0xff] %vm302, %v555
        %s562 = sand.u32 %s96, 1
        %s563 = scalar_lea.sflag [#allocation4], %s562
        %s564 = sand.u32 %s96, 1
        %s565 = smul.addr %s564, 32
        %s566 = scalar_lea.vmem [#allocation5], %s565
        // Predicated region
        $region37: #{resize_image.1} parent=31 // pred_check
          %p567 = pneg %p106
        $region38: #{resize_image.1} parent=31 // pred_check_branch
          %569 = sbr.rel (%p567) target = $region40
        $region39: #{resize_image.1} parent=31 // pred_region
          %s570 = smul.u32 4, %s20
          %s572 = ssub.s32 512, 512
          %573 = vsyncadd %s563, %s572
          %s574 = smul.addr %s570, 128
          %s575 = scalar_lea.hbm %s3, %s574
          %s576 = sshll.u32 %s566, 4
          %s577 = int_to_ptr.vmem [resolvable:$true] %s576
          %582 = dma.vmem_to_hbm [thread:$0]  %s577, 512, %s575, %s563, 128, 128, 8
        $region40: #{resize_image.1} parent=31 // pred_fallthru
          _
      $region32: #{resize_image.1} parent=5 // pred_fallthru
        _
      %p583 = scmp.le.s32.totalorder 2, %s15
      // Predicated region
      $region41: #{resize_image.1} parent=5 // pred_check
        %p584 = pneg %p583
      $region42: #{resize_image.1} parent=5 // pred_check_branch
        %586 = sbr.rel (%p584) target = $region44
      $region43: #{resize_image.1} parent=5 // pred_region
        %s587 = ssub.s32 %s15, 2
        // Predicated region
        $region45: #{resize_image.1} parent=43 // pred_check
          %p588 = pneg %p112
        $region46: #{resize_image.1} parent=43 // pred_check_branch
          %590 = sbr.rel (%p588) target = $region48
        $region47: #{resize_image.1} parent=43 // pred_region
          %s591 = sand.u32 %s97, 1
          %s592 = scalar_lea.sflag [#allocation4], %s591
          %s593 = sand.u32 %s97, 1
          %s594 = smul.addr %s593, 32
          %s595 = scalar_lea.vmem [#allocation5], %s594
          %596 = dma.done %s592, 512
        $region48: #{resize_image.1} parent=43 // pred_fallthru
          _
      $region44: #{resize_image.1} parent=5 // pred_fallthru
        _
    $region6: #{resize_image.1} parent=1 // loop_footer
      %s19 = sadd.s32 1, %s15
    $region7: #{resize_image.1} parent=1 // loop_footer_branch
      %14 = sbr.rel target = $region3
    $region8: #{resize_image.1} parent=1 // loop_exit
      _
    %597 = vsyncpa [#allocation3], 1
    %s598 = scalar_lea.sflag [#allocation3], 1
    %599 = vsyncpa %s598, 1
    %600 = vsyncpa [#allocation4], 1
    %s601 = scalar_lea.sflag [#allocation4], 1
    %602 = vsyncpa %s601, 1

</llo_original>
